<compile_context>
chip_gen: v6e
topology: v6e:2x2x1
jax: 0.10.0
libtpu: 0.0.40
codegen_flags: <defaults>
</compile_context>

<pallas_src>
import functools

import jax
import jax.numpy as jnp
from jax.experimental import pallas as pl
from jax.experimental.pallas import tpu as pltpu

_LANES = 128        # TPU vreg lane width; output slab is one (8, 128) f32 tile.
_HEADER_ROWS = 8    # param-slab rows 0..7: b0, b1, fc_b row, zero padding.


def _round_up(n, m):
    return -(-n // m) * m


def pack_contribution_rnn_params(raw, input_size):
    """One-time (load-time) packing of all parameters into a single VMEM slab.

    Slab layout, shape (8 + roundup(I,8) + roundup(H,8), 128), f32, zero-padded:
      row 0,  lanes [0:H) : b_ih_l0 + b_hh_l0
      row 1,  lanes [0:H) : b_ih_l1 + b_hh_l1
      row 2,  lane 0      : fc.bias  (== forward() return value)
      rows [8, 8+I),        lanes [0:H) : W_ih_l0[:, :I].T   (x part only; the
                                          hidden-feed part multiplies zeros)
      rows [8+I8, 8+I8+H),  lanes [0:H) : W_ih_l1.T
    W_hh_l* and fc.weight multiply zero hidden states / zero `out` and are
    therefore not packed (they have no effect on the forward pass).
    """
    I = int(input_size)
    H = int(raw["W_ih_l1"].shape[0])
    if H > _LANES:
        raise NotImplementedError("hidden_size > 128 requires a wider slab")
    I8 = _round_up(I, 8)
    H8 = _round_up(H, 8)
    rows = _HEADER_ROWS + I8 + H8

    f32 = lambda a: jnp.asarray(a, jnp.float32)
    w0 = f32(raw["W_ih_l0"])[:, :I].T                                  # (I, H)
    w1 = f32(raw["W_ih_l1"]).T                                         # (H, H)
    b0 = (f32(raw["b_ih_l0"]) + f32(raw["b_hh_l0"])).reshape(1, H)
    b1 = (f32(raw["b_ih_l1"]) + f32(raw["b_hh_l1"])).reshape(1, H)
    fcb = f32(raw["fc_b"]).reshape(1, 1)

    slab = jnp.zeros((rows, _LANES), jnp.float32)
    slab = slab.at[0:1, :H].set(b0)
    slab = slab.at[1:2, :H].set(b1)
    slab = slab.at[2:3, 0:1].set(fcb)
    slab = slab.at[_HEADER_ROWS:_HEADER_ROWS + I, :H].set(w0)
    w1_row = _HEADER_ROWS + I8
    slab = slab.at[w1_row:w1_row + H, :H].set(w1)
    return slab


def contribution_rnn_kernel(x_ref, p_ref, packed_ref, *, input_size, hidden_size):
    """Last RNN step + result packing (grid-less, single invocation).

    x_ref : (1, I)  last row of x.
    p_ref : (R, 128) pre-packed parameter slab (see pack_contribution_rnn_params).

    packed_ref (8, 128) f32 layout:
      row 0, lanes [0:H) : hn[0]  (layer-0 hidden of the last row)
      row 1, lanes [0:H) : hn[1]  == self.out after the loop
      row 2, lane 0      : y == fc(zeros) == fc.bias  (forward() return value)
      everything else    : exact zeros
    """
    I, H = input_size, hidden_size
    w0_row = _HEADER_ROWS
    w1_row = _HEADER_ROWS + _round_up(I, 8)

    x_last = x_ref[...]                               # (1, I)
    b0 = p_ref[0:1, :]                                # (1, 128), lanes >= H are 0
    b1 = p_ref[1:2, :]                                # (1, 128)
    y_row = p_ref[2:3, :]                             # fc.bias in lane 0
    w0 = p_ref[w0_row:w0_row + I, :]                  # (I, 128)
    w1 = p_ref[w1_row:w1_row + H, :]                  # (H, 128)

    # feed = cat(row, out) with out == zeros, h0 == zeros, seq_len == 1:
    #   layer0: tanh(row @ W_ih_l0[:, :I].T + b_ih_l0 + b_hh_l0)
    #   layer1: tanh(h1  @ W_ih_l1.T        + b_ih_l1 + b_hh_l1)
    # Padding lanes stay tanh(0) == 0 exactly.
    hi = jax.lax.Precision.HIGHEST
    h1 = jnp.tanh(jnp.dot(x_last, w0, precision=hi,
                          preferred_element_type=jnp.float32) + b0)      # (1, 128)
    h2 = jnp.tanh(jnp.dot(h1[:, :H], w1, precision=hi,
                          preferred_element_type=jnp.float32) + b1)      # (1, 128)

    # Zero-init slab + three static sublane-sliced row writes (no sublane concat).
    packed_ref[...] = jnp.zeros_like(packed_ref)
    packed_ref[0:1, :] = h1
    packed_ref[1:2, :] = h2
    packed_ref[2:3, :] = y_row


@functools.partial(jax.jit, static_argnames=("hidden_size",))
def contribution_rnn_forward(x, packed_params, *, hidden_size):
    """x: (T, input_size) f32.  packed_params: output of pack_contribution_rnn_params.

    Returns (y, hn):
      y  (1, 1) : forward() return value == fc.bias
      hn (2, H) : hn of the last loop iteration (both layers)
    self.out after the loop is hn[1:2] (identical value, no separate output).
    """
    T, I = x.shape
    H = hidden_size
    if T < 1:
        raise ValueError("x must contain at least one row (matches PyTorch loop)")
    if H > _LANES:
        raise NotImplementedError("hidden_size > 128 requires a wider slab")

    x_last = x[T - 1:T, :].astype(jnp.float32)        # (1, I): only per-call prep

    vmem = pl.BlockSpec(memory_space=pltpu.MemorySpace.VMEM)
    packed = pl.pallas_call(
        functools.partial(contribution_rnn_kernel, input_size=I, hidden_size=H),
        out_shape=jax.ShapeDtypeStruct((8, _LANES), jnp.float32),
        in_specs=[vmem, vmem],
        out_specs=vmem,
    )(x_last, packed_params)

    y = packed[2:3, 0:1]          # forward() return value, (1, 1)
    hn = packed[0:2, :H]          # hn of the last iteration, (2, H)
    return y, hn


if __name__ == "__main__":
    T, I, H = 8, 16, 32                              # seq rows, input_size, hidden_size
    key = jax.random.PRNGKey(0)
    keys = jax.random.split(key, 11)
    bound = 1.0 / jnp.sqrt(jnp.float32(H))
    u = lambda k, shape: jax.random.uniform(k, shape, jnp.float32, -bound, bound)

    # Deterministic parameters with nn.RNN / nn.Linear shapes (num_layers=2).
    raw = {
        "W_ih_l0": u(keys[0], (H, I + H)),
        "W_hh_l0": u(keys[1], (H, H)),               # multiplies zero hidden -> no effect
        "b_ih_l0": u(keys[2], (H,)),
        "b_hh_l0": u(keys[3], (H,)),
        "W_ih_l1": u(keys[4], (H, H)),
        "W_hh_l1": u(keys[5], (H, H)),               # multiplies zero hidden -> no effect
        "b_ih_l1": u(keys[6], (H,)),
        "b_hh_l1": u(keys[7], (H,)),
        "fc_w":    u(keys[8], (1, H)),               # multiplies zeros -> return is fc_b
        "fc_b":    u(keys[9], (1,)),
    }
    x = jax.random.normal(keys[10], (T, I), jnp.float32)

    # One-time parameter packing (hoisted out of the per-call path).
    packed_params = jax.block_until_ready(pack_contribution_rnn_params(raw, I))

    y, hn = contribution_rnn_forward(x, packed_params, hidden_size=H)
    jax.block_until_ready((y, hn))
    out_last = hn[1:2]                               # == self.out after the loop

    # Pure-JAX reference of the PyTorch forward (same quirky semantics).
    hi = jax.lax.Precision.HIGHEST
    feed = jnp.concatenate([x, jnp.zeros((T, H), jnp.float32)], axis=1)
    h1 = jnp.tanh(jnp.dot(feed, raw["W_ih_l0"].T, precision=hi)
                  + raw["b_ih_l0"] + raw["b_hh_l0"])
    h2 = jnp.tanh(jnp.dot(h1, raw["W_ih_l1"].T, precision=hi)
                  + raw["b_ih_l1"] + raw["b_hh_l1"])
    y_ref = (jnp.dot(jnp.zeros((1, H), jnp.float32), raw["fc_w"].T, precision=hi)
             + raw["fc_b"])

    assert y.shape == (1, 1)
    assert hn.shape == (2, H)
    assert jnp.allclose(y, y_ref, atol=1e-6), (y, y_ref)
    assert jnp.allclose(out_last, h2[-1:], atol=1e-4)
    assert jnp.allclose(hn, jnp.stack([h1[-1], h2[-1]]), atol=1e-4)

    print("KERNEL_OK")
</pallas_src>

<mosaic_0001>
module attributes {stable_mosaic.version = 11 : i64} {
  func.func @contribution_rnn_kernel(%arg0: memref<1x16xf32, #tpu.memory_space<vmem>>, %arg1: memref<56x128xf32, #tpu.memory_space<vmem>>, %arg2: memref<8x128xf32, #tpu.memory_space<vmem>>) attributes {dimension_semantics = [], scalar_prefetch = 0 : i64, scratch_operands = 0 : i64, tpu.core_type = #tpu.core_type<tc>} {
    %c0 = arith.constant 0 : index
    %c0_0 = arith.constant 0 : index
    %0 = vector.load %arg0[%c0, %c0_0] : memref<1x16xf32, #tpu.memory_space<vmem>>, vector<1x16xf32>
    %c0_1 = arith.constant 0 : index
    %c0_2 = arith.constant 0 : index
    %1 = vector.load %arg1[%c0_1, %c0_2] : memref<56x128xf32, #tpu.memory_space<vmem>>, vector<1x128xf32>
    %c1 = arith.constant 1 : index
    %c0_3 = arith.constant 0 : index
    %2 = vector.load %arg1[%c1, %c0_3] : memref<56x128xf32, #tpu.memory_space<vmem>>, vector<1x128xf32>
    %c2 = arith.constant 2 : index
    %c0_4 = arith.constant 0 : index
    %3 = vector.load %arg1[%c2, %c0_4] : memref<56x128xf32, #tpu.memory_space<vmem>>, vector<1x128xf32>
    %c8 = arith.constant 8 : index
    %c0_5 = arith.constant 0 : index
    %4 = vector.load %arg1[%c8, %c0_5] : memref<56x128xf32, #tpu.memory_space<vmem>>, vector<16x128xf32>
    %c24 = arith.constant 24 : index
    %c0_6 = arith.constant 0 : index
    %5 = vector.load %arg1[%c24, %c0_6] : memref<56x128xf32, #tpu.memory_space<vmem>>, vector<32x128xf32>
    %cst = arith.constant dense<0.000000e+00> : vector<1x128xf32>
    %6 = tpu.matmul %0, %4, %cst {dimension_numbers = #tpu.dot_dimension_numbers<[1], [0], [0], [1], [0, 0, 1, 1], [], []>, precision = #tpu.contract_precision<fp32>} : vector<1x16xf32>, vector<16x128xf32>, vector<1x128xf32> -> vector<1x128xf32>
    %7 = arith.addf %6, %1 : vector<1x128xf32>
    %8 = math.tanh %7 : vector<1x128xf32>
    %9 = vector.extract_strided_slice %8 {offsets = [0, 0], sizes = [1, 32], strides = [1, 1]} : vector<1x128xf32> to vector<1x32xf32>
    %cst_7 = arith.constant dense<0.000000e+00> : vector<1x128xf32>
    %10 = tpu.matmul %9, %5, %cst_7 {dimension_numbers = #tpu.dot_dimension_numbers<[1], [0], [0], [1], [0, 0, 1, 1], [], []>, precision = #tpu.contract_precision<fp32>} : vector<1x32xf32>, vector<32x128xf32>, vector<1x128xf32> -> vector<1x128xf32>
    %11 = arith.addf %10, %2 : vector<1x128xf32>
    %12 = math.tanh %11 : vector<1x128xf32>
    %cst_8 = arith.constant 0.000000e+00 : f32
    %13 = vector.broadcast %cst_8 : f32 to vector<8x128xf32>
    %c0_9 = arith.constant 0 : index
    %c0_10 = arith.constant 0 : index
    %14 = vector.load %arg2[%c0_9, %c0_10] : memref<8x128xf32, #tpu.memory_space<vmem>>, vector<8x128xf32>
    tpu.vector_store %arg2[%c0_9, %c0_10], %13 {strides = array<i32>} : memref<8x128xf32, #tpu.memory_space<vmem>>, vector<8x128xf32>,
    %c0_11 = arith.constant 0 : index
    %c0_12 = arith.constant 0 : index
    %15 = vector.load %arg2[%c0_11, %c0_12] : memref<8x128xf32, #tpu.memory_space<vmem>>, vector<1x128xf32>
    tpu.vector_store %arg2[%c0_11, %c0_12], %8 {strides = array<i32>} : memref<8x128xf32, #tpu.memory_space<vmem>>, vector<1x128xf32>,
    %c1_13 = arith.constant 1 : index
    %c0_14 = arith.constant 0 : index
    %16 = vector.load %arg2[%c1_13, %c0_14] : memref<8x128xf32, #tpu.memory_space<vmem>>, vector<1x128xf32>
    tpu.vector_store %arg2[%c1_13, %c0_14], %12 {strides = array<i32>} : memref<8x128xf32, #tpu.memory_space<vmem>>, vector<1x128xf32>,
    %c2_15 = arith.constant 2 : index
    %c0_16 = arith.constant 0 : index
    %17 = vector.load %arg2[%c2_15, %c0_16] : memref<8x128xf32, #tpu.memory_space<vmem>>, vector<1x128xf32>
    tpu.vector_store %arg2[%c2_15, %c0_16], %3 {strides = array<i32>} : memref<8x128xf32, #tpu.memory_space<vmem>>, vector<1x128xf32>,
    return
  }
}

</mosaic_0001>

<llo_original>
// kernel: contribution_rnn_forward.1
$region0: #{contribution_rnn_forward.1}
  #allocation0 [shape = 'u32[]', space=smem, size = 0x4, offset = 0x4, fixed_abs, tag = 'smem constant byte address 0x4 - core index']
  #allocation1 [shape = 'u32[144,128]{1,0:T(1,128)}', space=vmem, size = 0x12000, scoped, tag = 'internal scratch']
  %s0 = inlined_call_operand.vmem [shape: f32[1,16], index: 0, kind: input, shape index: {}]
  %s1 = inlined_call_operand.hbm [shape: f32[56,128], index: 1, kind: input, shape index: {}]
  %s2 = inlined_call_operand.vmem [shape: f32[8,128], index: 2, kind: output, shape index: {}]
  %s3 = sld [smem:[#allocation0]]
  $region22: #{contribution_rnn_forward.1} parent=0
    _
  %s5 = ssub.s32 1, %s3
  %s6 = scalar_select 0, %s5, %s3
  $region1: #{contribution_rnn_forward.1} parent=0
    #allocation2 [shape = 'u8[28672]{0}', space=vmem, size = 0x7000, scoped, tag = 'input window, operand 1, single buffered']
    #allocation3 [shape = 's32[1]{0}', space=sflag, size = 0x4, scoped, tag = 'scoped memory for contribution_rnn_forward.1']
    %7 = vsyncpa [#allocation3], 0
    // Predicated region
    $region2: #{contribution_rnn_forward.1} parent=1 // pred_check
      _
    $region3: #{contribution_rnn_forward.1} parent=1 // pred_check_branch
      %9 = sbr.rel (0) target = $region5
    $region4: #{contribution_rnn_forward.1} parent=1 // pred_region
      _
    $region5: #{contribution_rnn_forward.1} parent=1 // pred_fallthru
      _
    // Predicated region
    $region6: #{contribution_rnn_forward.1} parent=1 // pred_check
      _
    $region7: #{contribution_rnn_forward.1} parent=1 // pred_check_branch
      %11 = sbr.rel (0) target = $region9
    $region8: #{contribution_rnn_forward.1} parent=1 // pred_region
      %s13 = ssub.s32 896, 896
      %14 = vsyncadd [#allocation3], %s13
      %s15 = sshll.u32 [#allocation2], 4
      %s16 = int_to_ptr.vmem [resolvable:$true] %s15
      %21 = dma.hbm_to_vmem [thread:$0]  %s1, 896, %s16, [#allocation3], 128, 128, 8
    $region9: #{contribution_rnn_forward.1} parent=1 // pred_fallthru
      _
    // Predicated region
    $region10: #{contribution_rnn_forward.1} parent=1 // pred_check
      _
    $region11: #{contribution_rnn_forward.1} parent=1 // pred_check_branch
      %23 = sbr.rel (0) target = $region13
    $region12: #{contribution_rnn_forward.1} parent=1 // pred_region
      %24 = dma.done [#allocation3], 896
    $region13: #{contribution_rnn_forward.1} parent=1 // pred_fallthru
      _
    %v25 = vld [vmem:[%s0] sm:$0x1]
    %v26 = vld [vmem:[#allocation2] sm:$0x1]
    %v27 = vld [vmem:[#allocation2 + $0x1] sm:$0x1]
    %v28 = vld [vmem:[#allocation2 + $0x2] sm:$0x1]
    %v29 = vld [vmem:[#allocation2 + $0x8] sm:$0xff]
    %v30 = vld [vmem:[#allocation2 + $0x10] sm:$0xff]
    %v31 = vld [vmem:[#allocation2 + $0x18] sm:$0xff]
    %v32 = vld [vmem:[#allocation2 + $0x20] sm:$0xff]
    %v33 = vld [vmem:[#allocation2 + $0x28] sm:$0xff]
    %v34 = vld [vmem:[#allocation2 + $0x30] sm:$0xff]
    %vm35 = vcmask 130048
    %v37 = vsel %vm35, %v25, 0
    %39 = vmatprep.subr.mxu0 0.0
    %40 = vmatpush1.msra.mxu0 0.0
    %41 = vmatprep.subr.mxu0 0.0
    %42 = vmatpush1.msra.mxu0 0.0
    %43 = vmatprep.subr.mxu0 0.0
    %44 = vmatpush1.msra.mxu0 0.0
    %45 = vmatprep.subr.mxu0 0.0
    %46 = vmatpush1.msra.mxu0 0.0
    %47 = vmatprep.subr.mxu0 0.0
    %48 = vmatpush1.msra.mxu0 0.0
    %49 = vmatprep.subr.mxu0 0.0
    %50 = vmatpush1.msra.mxu0 0.0
    %51 = vmatprep.subr.mxu0 0.0
    %52 = vmatpush1.msra.mxu0 0.0
    %53 = vmatprep.subr.mxu0 0.0
    %54 = vmatpush1.msra.mxu0 0.0
    %55 = vmatprep.subr.mxu0 0.0
    %56 = vmatpush1.msra.mxu0 0.0
    %57 = vmatprep.subr.mxu0 0.0
    %58 = vmatpush1.msra.mxu0 0.0
    %59 = vmatprep.subr.mxu0 0.0
    %60 = vmatpush1.msra.mxu0 0.0
    %61 = vmatprep.subr.mxu0 0.0
    %62 = vmatpush1.msra.mxu0 0.0
    %63 = vmatprep.subr.mxu0 0.0
    %64 = vmatpush1.msra.mxu0 0.0
    %65 = vmatprep.subr.mxu0 0.0
    %66 = vmatpush1.msra.mxu0 0.0
    %67 = vmatprep.subr.mxu0 0.0
    %v68 = vand.u32 %v30, 4294901760
    %69 = vmatpush1.msra.mxu0 %v68
    %70 = vmatprep.subr.mxu0 0.0
    %v71 = vand.u32 %v29, 4294901760
    %72 = vmatpush1.msra.mxu0 %v71
    %73 = vmatprep.subr.mxu0 0.0
    %74 = vmatpush2.msra.mxu0 0.0
    %75 = vmatprep.subr.mxu0 0.0
    %76 = vmatpush2.msra.mxu0 0.0
    %77 = vmatprep.subr.mxu0 0.0
    %78 = vmatpush2.msra.mxu0 0.0
    %79 = vmatprep.subr.mxu0 0.0
    %80 = vmatpush2.msra.mxu0 0.0
    %81 = vmatprep.subr.mxu0 0.0
    %82 = vmatpush2.msra.mxu0 0.0
    %83 = vmatprep.subr.mxu0 0.0
    %84 = vmatpush2.msra.mxu0 0.0
    %85 = vmatprep.subr.mxu0 0.0
    %86 = vmatpush2.msra.mxu0 0.0
    %87 = vmatprep.subr.mxu0 0.0
    %88 = vmatpush2.msra.mxu0 0.0
    %89 = vmatprep.subr.mxu0 0.0
    %90 = vmatpush2.msra.mxu0 0.0
    %91 = vmatprep.subr.mxu0 0.0
    %92 = vmatpush2.msra.mxu0 0.0
    %93 = vmatprep.subr.mxu0 0.0
    %94 = vmatpush2.msra.mxu0 0.0
    %95 = vmatprep.subr.mxu0 0.0
    %96 = vmatpush2.msra.mxu0 0.0
    %97 = vmatprep.subr.mxu0 0.0
    %98 = vmatpush2.msra.mxu0 0.0
    %99 = vmatprep.subr.mxu0 0.0
    %100 = vmatpush2.msra.mxu0 0.0
    %101 = vmatprep.subr.mxu0 0.0
    %102 = vmatpush2.msra.mxu0 0.0
    %103 = vmatprep.subr.mxu0 0.0
    %104 = vmatpush2.msra.mxu0 0.0
    %105 = vmatprep.mubr.f32.mxu0 0.0
    %v106 = vand.u32 %v37, 4294901760
    %v107 = vsub.f32 %v37, %v106
    %v108 = vand.u32 %v107, 4294901760
    %v109 = vsub.f32 %v107, %v108
    %v110 = vand.u32 %v109, 4294901760
    %111 = vmatmul.mubr.f32.gmra.mxu0 %v110
    %v112 = vpop.f32.mrf.mxu0
    %v113 = vadd.f32 %v26, %v112
    %v114 = vpop.f32.mrf.mxu0
    %115 = vdwg.mxu0
    %116 = vmatprep.subr.mxu0 0.0
    %117 = vmatpush1.msra.mxu0 0.0
    %118 = vmatprep.subr.mxu0 0.0
    %119 = vmatpush1.msra.mxu0 0.0
    %120 = vmatprep.subr.mxu0 0.0
    %121 = vmatpush1.msra.mxu0 0.0
    %122 = vmatprep.subr.mxu0 0.0
    %123 = vmatpush1.msra.mxu0 0.0
    %124 = vmatprep.subr.mxu0 0.0
    %125 = vmatpush1.msra.mxu0 0.0
    %126 = vmatprep.subr.mxu0 0.0
    %127 = vmatpush1.msra.mxu0 0.0
    %128 = vmatprep.subr.mxu0 0.0
    %129 = vmatpush1.msra.mxu0 0.0
    %130 = vmatprep.subr.mxu0 0.0
    %131 = vmatpush1.msra.mxu0 0.0
    %132 = vmatprep.subr.mxu0 0.0
    %133 = vmatpush1.msra.mxu0 0.0
    %134 = vmatprep.subr.mxu0 0.0
    %135 = vmatpush1.msra.mxu0 0.0
    %136 = vmatprep.subr.mxu0 0.0
    %137 = vmatpush1.msra.mxu0 0.0
    %138 = vmatprep.subr.mxu0 0.0
    %139 = vmatpush1.msra.mxu0 0.0
    %140 = vmatprep.subr.mxu0 0.0
    %141 = vmatpush1.msra.mxu0 0.0
    %142 = vmatprep.subr.mxu0 0.0
    %143 = vmatpush1.msra.mxu0 0.0
    %144 = vmatprep.subr.mxu0 0.0
    %v145 = vand.u32 %v30, 4294901760
    %v146 = vsub.f32 %v30, %v145
    %v147 = vand.u32 %v146, 4294901760
    %v148 = vsub.f32 %v146, %v147
    %v149 = vand.u32 %v148, 4294901760
    %150 = vmatpush1.msra.mxu0 %v149
    %151 = vmatprep.subr.mxu0 0.0
    %v152 = vand.u32 %v29, 4294901760
    %v153 = vsub.f32 %v29, %v152
    %v154 = vand.u32 %v153, 4294901760
    %v155 = vsub.f32 %v153, %v154
    %v156 = vand.u32 %v155, 4294901760
    %157 = vmatpush1.msra.mxu0 %v156
    %158 = vmatprep.subr.mxu0 0.0
    %159 = vmatpush2.msra.mxu0 0.0
    %160 = vmatprep.subr.mxu0 0.0
    %161 = vmatpush2.msra.mxu0 0.0
    %162 = vmatprep.subr.mxu0 0.0
    %163 = vmatpush2.msra.mxu0 0.0
    %164 = vmatprep.subr.mxu0 0.0
    %165 = vmatpush2.msra.mxu0 0.0
    %166 = vmatprep.subr.mxu0 0.0
    %167 = vmatpush2.msra.mxu0 0.0
    %168 = vmatprep.subr.mxu0 0.0
    %169 = vmatpush2.msra.mxu0 0.0
    %170 = vmatprep.subr.mxu0 0.0
    %171 = vmatpush2.msra.mxu0 0.0
    %172 = vmatprep.subr.mxu0 0.0
    %173 = vmatpush2.msra.mxu0 0.0
    %174 = vmatprep.subr.mxu0 0.0
    %175 = vmatpush2.msra.mxu0 0.0
    %176 = vmatprep.subr.mxu0 0.0
    %177 = vmatpush2.msra.mxu0 0.0
    %178 = vmatprep.subr.mxu0 0.0
    %179 = vmatpush2.msra.mxu0 0.0
    %180 = vmatprep.subr.mxu0 0.0
    %181 = vmatpush2.msra.mxu0 0.0
    %182 = vmatprep.subr.mxu0 0.0
    %183 = vmatpush2.msra.mxu0 0.0
    %184 = vmatprep.subr.mxu0 0.0
    %185 = vmatpush2.msra.mxu0 0.0
    %186 = vmatprep.subr.mxu0 0.0
    %187 = vmatpush2.msra.mxu0 0.0
    %188 = vmatprep.subr.mxu0 0.0
    %189 = vmatpush2.msra.mxu0 0.0
    %190 = vmatprep.mubr.f32.mxu0 0.0
    %v191 = vand.u32 %v37, 4294901760
    %192 = vmatmul.mubr.f32.gmra.mxu0 %v191
    %v193 = vpop.f32.mrf.mxu0
    %v194 = vadd.f32 %v113, %v193
    %v195 = vpop.f32.mrf.mxu0
    %196 = vdwg.mxu0
    %197 = vmatprep.subr.mxu0 0.0
    %198 = vmatpush1.msra.mxu0 0.0
    %199 = vmatprep.subr.mxu0 0.0
    %200 = vmatpush1.msra.mxu0 0.0
    %201 = vmatprep.subr.mxu0 0.0
    %202 = vmatpush1.msra.mxu0 0.0
    %203 = vmatprep.subr.mxu0 0.0
    %204 = vmatpush1.msra.mxu0 0.0
    %205 = vmatprep.subr.mxu0 0.0
    %206 = vmatpush1.msra.mxu0 0.0
    %207 = vmatprep.subr.mxu0 0.0
    %208 = vmatpush1.msra.mxu0 0.0
    %209 = vmatprep.subr.mxu0 0.0
    %210 = vmatpush1.msra.mxu0 0.0
    %211 = vmatprep.subr.mxu0 0.0
    %212 = vmatpush1.msra.mxu0 0.0
    %213 = vmatprep.subr.mxu0 0.0
    %214 = vmatpush1.msra.mxu0 0.0
    %215 = vmatprep.subr.mxu0 0.0
    %216 = vmatpush1.msra.mxu0 0.0
    %217 = vmatprep.subr.mxu0 0.0
    %218 = vmatpush1.msra.mxu0 0.0
    %219 = vmatprep.subr.mxu0 0.0
    %220 = vmatpush1.msra.mxu0 0.0
    %221 = vmatprep.subr.mxu0 0.0
    %222 = vmatpush1.msra.mxu0 0.0
    %223 = vmatprep.subr.mxu0 0.0
    %224 = vmatpush1.msra.mxu0 0.0
    %225 = vmatprep.subr.mxu0 0.0
    %v226 = vand.u32 %v30, 4294901760
    %v227 = vsub.f32 %v30, %v226
    %228 = vmatpush1.msra.mxu0 %v227
    %229 = vmatprep.subr.mxu0 0.0
    %v230 = vand.u32 %v29, 4294901760
    %v231 = vsub.f32 %v29, %v230
    %232 = vmatpush1.msra.mxu0 %v231
    %233 = vmatprep.subr.mxu0 0.0
    %234 = vmatpush2.msra.mxu0 0.0
    %235 = vmatprep.subr.mxu0 0.0
    %236 = vmatpush2.msra.mxu0 0.0
    %237 = vmatprep.subr.mxu0 0.0
    %238 = vmatpush2.msra.mxu0 0.0
    %239 = vmatprep.subr.mxu0 0.0
    %240 = vmatpush2.msra.mxu0 0.0
    %241 = vmatprep.subr.mxu0 0.0
    %242 = vmatpush2.msra.mxu0 0.0
    %243 = vmatprep.subr.mxu0 0.0
    %244 = vmatpush2.msra.mxu0 0.0
    %245 = vmatprep.subr.mxu0 0.0
    %246 = vmatpush2.msra.mxu0 0.0
    %247 = vmatprep.subr.mxu0 0.0
    %248 = vmatpush2.msra.mxu0 0.0
    %249 = vmatprep.subr.mxu0 0.0
    %250 = vmatpush2.msra.mxu0 0.0
    %251 = vmatprep.subr.mxu0 0.0
    %252 = vmatpush2.msra.mxu0 0.0
    %253 = vmatprep.subr.mxu0 0.0
    %254 = vmatpush2.msra.mxu0 0.0
    %255 = vmatprep.subr.mxu0 0.0
    %256 = vmatpush2.msra.mxu0 0.0
    %257 = vmatprep.subr.mxu0 0.0
    %258 = vmatpush2.msra.mxu0 0.0
    %259 = vmatprep.subr.mxu0 0.0
    %260 = vmatpush2.msra.mxu0 0.0
    %261 = vmatprep.subr.mxu0 0.0
    %262 = vmatpush2.msra.mxu0 0.0
    %263 = vmatprep.subr.mxu0 0.0
    %264 = vmatpush2.msra.mxu0 0.0
    %265 = vmatprep.mubr.f32.mxu0 0.0
    %v266 = vand.u32 %v37, 4294901760
    %v267 = vsub.f32 %v37, %v266
    %268 = vmatmul.mubr.f32.gmra.mxu0 %v267
    %v269 = vpop.f32.mrf.mxu0
    %v270 = vadd.f32 %v194, %v269
    %v271 = vpop.f32.mrf.mxu0
    %272 = vdwg.mxu0
    %273 = vmatprep.subr.mxu0 0.0
    %274 = vmatpush1.msra.mxu0 0.0
    %275 = vmatprep.subr.mxu0 0.0
    %276 = vmatpush1.msra.mxu0 0.0
    %277 = vmatprep.subr.mxu0 0.0
    %278 = vmatpush1.msra.mxu0 0.0
    %279 = vmatprep.subr.mxu0 0.0
    %280 = vmatpush1.msra.mxu0 0.0
    %281 = vmatprep.subr.mxu0 0.0
    %282 = vmatpush1.msra.mxu0 0.0
    %283 = vmatprep.subr.mxu0 0.0
    %284 = vmatpush1.msra.mxu0 0.0
    %285 = vmatprep.subr.mxu0 0.0
    %286 = vmatpush1.msra.mxu0 0.0
    %287 = vmatprep.subr.mxu0 0.0
    %288 = vmatpush1.msra.mxu0 0.0
    %289 = vmatprep.subr.mxu0 0.0
    %290 = vmatpush1.msra.mxu0 0.0
    %291 = vmatprep.subr.mxu0 0.0
    %292 = vmatpush1.msra.mxu0 0.0
    %293 = vmatprep.subr.mxu0 0.0
    %294 = vmatpush1.msra.mxu0 0.0
    %295 = vmatprep.subr.mxu0 0.0
    %296 = vmatpush1.msra.mxu0 0.0
    %297 = vmatprep.subr.mxu0 0.0
    %298 = vmatpush1.msra.mxu0 0.0
    %299 = vmatprep.subr.mxu0 0.0
    %300 = vmatpush1.msra.mxu0 0.0
    %301 = vmatprep.subr.mxu0 0.0
    %v302 = vand.u32 %v30, 4294901760
    %303 = vmatpush1.msra.mxu0 %v302
    %304 = vmatprep.subr.mxu0 0.0
    %v305 = vand.u32 %v29, 4294901760
    %306 = vmatpush1.msra.mxu0 %v305
    %307 = vmatprep.subr.mxu0 0.0
    %308 = vmatpush2.msra.mxu0 0.0
    %309 = vmatprep.subr.mxu0 0.0
    %310 = vmatpush2.msra.mxu0 0.0
    %311 = vmatprep.subr.mxu0 0.0
    %312 = vmatpush2.msra.mxu0 0.0
    %313 = vmatprep.subr.mxu0 0.0
    %314 = vmatpush2.msra.mxu0 0.0
    %315 = vmatprep.subr.mxu0 0.0
    %316 = vmatpush2.msra.mxu0 0.0
    %317 = vmatprep.subr.mxu0 0.0
    %318 = vmatpush2.msra.mxu0 0.0
    %319 = vmatprep.subr.mxu0 0.0
    %320 = vmatpush2.msra.mxu0 0.0
    %321 = vmatprep.subr.mxu0 0.0
    %322 = vmatpush2.msra.mxu0 0.0
    %323 = vmatprep.subr.mxu0 0.0
    %324 = vmatpush2.msra.mxu0 0.0
    %325 = vmatprep.subr.mxu0 0.0
    %326 = vmatpush2.msra.mxu0 0.0
    %327 = vmatprep.subr.mxu0 0.0
    %328 = vmatpush2.msra.mxu0 0.0
    %329 = vmatprep.subr.mxu0 0.0
    %330 = vmatpush2.msra.mxu0 0.0
    %331 = vmatprep.subr.mxu0 0.0
    %332 = vmatpush2.msra.mxu0 0.0
    %333 = vmatprep.subr.mxu0 0.0
    %334 = vmatpush2.msra.mxu0 0.0
    %335 = vmatprep.subr.mxu0 0.0
    %336 = vmatpush2.msra.mxu0 0.0
    %337 = vmatprep.subr.mxu0 0.0
    %338 = vmatpush2.msra.mxu0 0.0
    %339 = vmatprep.mubr.f32.mxu0 0.0
    %v340 = vand.u32 %v37, 4294901760
    %v341 = vsub.f32 %v37, %v340
    %v342 = vand.u32 %v341, 4294901760
    %343 = vmatmul.mubr.f32.gmra.mxu0 %v342
    %v344 = vpop.f32.mrf.mxu0
    %v345 = vadd.f32 %v270, %v344
    %v346 = vpop.f32.mrf.mxu0
    %347 = vdwg.mxu0
    %348 = vmatprep.subr.mxu0 0.0
    %349 = vmatpush1.msra.mxu0 0.0
    %350 = vmatprep.subr.mxu0 0.0
    %351 = vmatpush1.msra.mxu0 0.0
    %352 = vmatprep.subr.mxu0 0.0
    %353 = vmatpush1.msra.mxu0 0.0
    %354 = vmatprep.subr.mxu0 0.0
    %355 = vmatpush1.msra.mxu0 0.0
    %356 = vmatprep.subr.mxu0 0.0
    %357 = vmatpush1.msra.mxu0 0.0
    %358 = vmatprep.subr.mxu0 0.0
    %359 = vmatpush1.msra.mxu0 0.0
    %360 = vmatprep.subr.mxu0 0.0
    %361 = vmatpush1.msra.mxu0 0.0
    %362 = vmatprep.subr.mxu0 0.0
    %363 = vmatpush1.msra.mxu0 0.0
    %364 = vmatprep.subr.mxu0 0.0
    %365 = vmatpush1.msra.mxu0 0.0
    %366 = vmatprep.subr.mxu0 0.0
    %367 = vmatpush1.msra.mxu0 0.0
    %368 = vmatprep.subr.mxu0 0.0
    %369 = vmatpush1.msra.mxu0 0.0
    %370 = vmatprep.subr.mxu0 0.0
    %371 = vmatpush1.msra.mxu0 0.0
    %372 = vmatprep.subr.mxu0 0.0
    %373 = vmatpush1.msra.mxu0 0.0
    %374 = vmatprep.subr.mxu0 0.0
    %375 = vmatpush1.msra.mxu0 0.0
    %376 = vmatprep.subr.mxu0 0.0
    %v377 = vand.u32 %v30, 4294901760
    %v378 = vsub.f32 %v30, %v377
    %v379 = vand.u32 %v378, 4294901760
    %380 = vmatpush1.msra.mxu0 %v379
    %381 = vmatprep.subr.mxu0 0.0
    %v382 = vand.u32 %v29, 4294901760
    %v383 = vsub.f32 %v29, %v382
    %v384 = vand.u32 %v383, 4294901760
    %385 = vmatpush1.msra.mxu0 %v384
    %386 = vmatprep.subr.mxu0 0.0
    %387 = vmatpush2.msra.mxu0 0.0
    %388 = vmatprep.subr.mxu0 0.0
    %389 = vmatpush2.msra.mxu0 0.0
    %390 = vmatprep.subr.mxu0 0.0
    %391 = vmatpush2.msra.mxu0 0.0
    %392 = vmatprep.subr.mxu0 0.0
    %393 = vmatpush2.msra.mxu0 0.0
    %394 = vmatprep.subr.mxu0 0.0
    %395 = vmatpush2.msra.mxu0 0.0
    %396 = vmatprep.subr.mxu0 0.0
    %397 = vmatpush2.msra.mxu0 0.0
    %398 = vmatprep.subr.mxu0 0.0
    %399 = vmatpush2.msra.mxu0 0.0
    %400 = vmatprep.subr.mxu0 0.0
    %401 = vmatpush2.msra.mxu0 0.0
    %402 = vmatprep.subr.mxu0 0.0
    %403 = vmatpush2.msra.mxu0 0.0
    %404 = vmatprep.subr.mxu0 0.0
    %405 = vmatpush2.msra.mxu0 0.0
    %406 = vmatprep.subr.mxu0 0.0
    %407 = vmatpush2.msra.mxu0 0.0
    %408 = vmatprep.subr.mxu0 0.0
    %409 = vmatpush2.msra.mxu0 0.0
    %410 = vmatprep.subr.mxu0 0.0
    %411 = vmatpush2.msra.mxu0 0.0
    %412 = vmatprep.subr.mxu0 0.0
    %413 = vmatpush2.msra.mxu0 0.0
    %414 = vmatprep.subr.mxu0 0.0
    %415 = vmatpush2.msra.mxu0 0.0
    %416 = vmatprep.subr.mxu0 0.0
    %417 = vmatpush2.msra.mxu0 0.0
    %418 = vmatprep.mubr.f32.mxu0 0.0
    %v419 = vand.u32 %v37, 4294901760
    %420 = vmatmul.mubr.f32.gmra.mxu0 %v419
    %v421 = vpop.f32.mrf.mxu0
    %v422 = vadd.f32 %v345, %v421
    %v423 = vpop.f32.mrf.mxu0
    %424 = vdwg.mxu0
    %425 = vmatprep.subr.mxu0 0.0
    %426 = vmatpush1.msra.mxu0 0.0
    %427 = vmatprep.subr.mxu0 0.0
    %428 = vmatpush1.msra.mxu0 0.0
    %429 = vmatprep.subr.mxu0 0.0
    %430 = vmatpush1.msra.mxu0 0.0
    %431 = vmatprep.subr.mxu0 0.0
    %432 = vmatpush1.msra.mxu0 0.0
    %433 = vmatprep.subr.mxu0 0.0
    %434 = vmatpush1.msra.mxu0 0.0
    %435 = vmatprep.subr.mxu0 0.0
    %436 = vmatpush1.msra.mxu0 0.0
    %437 = vmatprep.subr.mxu0 0.0
    %438 = vmatpush1.msra.mxu0 0.0
    %439 = vmatprep.subr.mxu0 0.0
    %440 = vmatpush1.msra.mxu0 0.0
    %441 = vmatprep.subr.mxu0 0.0
    %442 = vmatpush1.msra.mxu0 0.0
    %443 = vmatprep.subr.mxu0 0.0
    %444 = vmatpush1.msra.mxu0 0.0
    %445 = vmatprep.subr.mxu0 0.0
    %446 = vmatpush1.msra.mxu0 0.0
    %447 = vmatprep.subr.mxu0 0.0
    %448 = vmatpush1.msra.mxu0 0.0
    %449 = vmatprep.subr.mxu0 0.0
    %450 = vmatpush1.msra.mxu0 0.0
    %451 = vmatprep.subr.mxu0 0.0
    %452 = vmatpush1.msra.mxu0 0.0
    %453 = vmatprep.subr.mxu0 0.0
    %v454 = vand.u32 %v30, 4294901760
    %455 = vmatpush1.msra.mxu0 %v454
    %456 = vmatprep.subr.mxu0 0.0
    %v457 = vand.u32 %v29, 4294901760
    %458 = vmatpush1.msra.mxu0 %v457
    %459 = vmatprep.subr.mxu0 0.0
    %460 = vmatpush2.msra.mxu0 0.0
    %461 = vmatprep.subr.mxu0 0.0
    %462 = vmatpush2.msra.mxu0 0.0
    %463 = vmatprep.subr.mxu0 0.0
    %464 = vmatpush2.msra.mxu0 0.0
    %465 = vmatprep.subr.mxu0 0.0
    %466 = vmatpush2.msra.mxu0 0.0
    %467 = vmatprep.subr.mxu0 0.0
    %468 = vmatpush2.msra.mxu0 0.0
    %469 = vmatprep.subr.mxu0 0.0
    %470 = vmatpush2.msra.mxu0 0.0
    %471 = vmatprep.subr.mxu0 0.0
    %472 = vmatpush2.msra.mxu0 0.0
    %473 = vmatprep.subr.mxu0 0.0
    %474 = vmatpush2.msra.mxu0 0.0
    %475 = vmatprep.subr.mxu0 0.0
    %476 = vmatpush2.msra.mxu0 0.0
    %477 = vmatprep.subr.mxu0 0.0
    %478 = vmatpush2.msra.mxu0 0.0
    %479 = vmatprep.subr.mxu0 0.0
    %480 = vmatpush2.msra.mxu0 0.0
    %481 = vmatprep.subr.mxu0 0.0
    %482 = vmatpush2.msra.mxu0 0.0
    %483 = vmatprep.subr.mxu0 0.0
    %484 = vmatpush2.msra.mxu0 0.0
    %485 = vmatprep.subr.mxu0 0.0
    %486 = vmatpush2.msra.mxu0 0.0
    %487 = vmatprep.subr.mxu0 0.0
    %488 = vmatpush2.msra.mxu0 0.0
    %489 = vmatprep.subr.mxu0 0.0
    %490 = vmatpush2.msra.mxu0 0.0
    %491 = vmatprep.mubr.f32.mxu0 0.0
    %v492 = vand.u32 %v37, 4294901760
    %493 = vmatmul.mubr.f32.gmra.mxu0 %v492
    %v494 = vpop.f32.mrf.mxu0
    %v495 = vadd.f32 %v422, %v494
    %v496 = vpop.f32.mrf.mxu0
    %497 = vdwg.mxu0
    %v498 = vtanh.pop %v495
    %vm499 = vcmask 261120
    %v501 = vsel %vm499, %v498, 0
    %503 = vmatprep.subr.mxu0 0.0
    %504 = vmatpush1.msra.mxu0 0.0
    %505 = vmatprep.subr.mxu0 0.0
    %506 = vmatpush1.msra.mxu0 0.0
    %507 = vmatprep.subr.mxu0 0.0
    %508 = vmatpush1.msra.mxu0 0.0
    %509 = vmatprep.subr.mxu0 0.0
    %510 = vmatpush1.msra.mxu0 0.0
    %511 = vmatprep.subr.mxu0 0.0
    %512 = vmatpush1.msra.mxu0 0.0
    %513 = vmatprep.subr.mxu0 0.0
    %514 = vmatpush1.msra.mxu0 0.0
    %515 = vmatprep.subr.mxu0 0.0
    %516 = vmatpush1.msra.mxu0 0.0
    %517 = vmatprep.subr.mxu0 0.0
    %518 = vmatpush1.msra.mxu0 0.0
    %519 = vmatprep.subr.mxu0 0.0
    %520 = vmatpush1.msra.mxu0 0.0
    %521 = vmatprep.subr.mxu0 0.0
    %522 = vmatpush1.msra.mxu0 0.0
    %523 = vmatprep.subr.mxu0 0.0
    %524 = vmatpush1.msra.mxu0 0.0
    %525 = vmatprep.subr.mxu0 0.0
    %526 = vmatpush1.msra.mxu0 0.0
    %527 = vmatprep.subr.mxu0 0.0
    %v528 = vand.u32 %v34, 4294901760
    %529 = vmatpush1.msra.mxu0 %v528
    %530 = vmatprep.subr.mxu0 0.0
    %v531 = vand.u32 %v33, 4294901760
    %532 = vmatpush1.msra.mxu0 %v531
    %533 = vmatprep.subr.mxu0 0.0
    %v534 = vand.u32 %v32, 4294901760
    %535 = vmatpush1.msra.mxu0 %v534
    %536 = vmatprep.subr.mxu0 0.0
    %v537 = vand.u32 %v31, 4294901760
    %538 = vmatpush1.msra.mxu0 %v537
    %539 = vmatprep.subr.mxu0 0.0
    %540 = vmatpush2.msra.mxu0 0.0
    %541 = vmatprep.subr.mxu0 0.0
    %542 = vmatpush2.msra.mxu0 0.0
    %543 = vmatprep.subr.mxu0 0.0
    %544 = vmatpush2.msra.mxu0 0.0
    %545 = vmatprep.subr.mxu0 0.0
    %546 = vmatpush2.msra.mxu0 0.0
    %547 = vmatprep.subr.mxu0 0.0
    %548 = vmatpush2.msra.mxu0 0.0
    %549 = vmatprep.subr.mxu0 0.0
    %550 = vmatpush2.msra.mxu0 0.0
    %551 = vmatprep.subr.mxu0 0.0
    %552 = vmatpush2.msra.mxu0 0.0
    %553 = vmatprep.subr.mxu0 0.0
    %554 = vmatpush2.msra.mxu0 0.0
    %555 = vmatprep.subr.mxu0 0.0
    %556 = vmatpush2.msra.mxu0 0.0
    %557 = vmatprep.subr.mxu0 0.0
    %558 = vmatpush2.msra.mxu0 0.0
    %559 = vmatprep.subr.mxu0 0.0
    %560 = vmatpush2.msra.mxu0 0.0
    %561 = vmatprep.subr.mxu0 0.0
    %562 = vmatpush2.msra.mxu0 0.0
    %563 = vmatprep.subr.mxu0 0.0
    %564 = vmatpush2.msra.mxu0 0.0
    %565 = vmatprep.subr.mxu0 0.0
    %566 = vmatpush2.msra.mxu0 0.0
    %567 = vmatprep.subr.mxu0 0.0
    %568 = vmatpush2.msra.mxu0 0.0
    %569 = vmatprep.subr.mxu0 0.0
    %570 = vmatpush2.msra.mxu0 0.0
    %571 = vmatprep.mubr.f32.mxu0 0.0
    %v572 = vand.u32 %v501, 4294901760
    %v573 = vsub.f32 %v501, %v572
    %v574 = vand.u32 %v573, 4294901760
    %v575 = vsub.f32 %v573, %v574
    %v576 = vand.u32 %v575, 4294901760
    %577 = vmatmul.mubr.f32.gmra.mxu0 %v576
    %v578 = vpop.f32.mrf.mxu0
    %v579 = vadd.f32 %v27, %v578
    %v580 = vpop.f32.mrf.mxu0
    %581 = vdwg.mxu0
    %582 = vmatprep.subr.mxu0 0.0
    %583 = vmatpush1.msra.mxu0 0.0
    %584 = vmatprep.subr.mxu0 0.0
    %585 = vmatpush1.msra.mxu0 0.0
    %586 = vmatprep.subr.mxu0 0.0
    %587 = vmatpush1.msra.mxu0 0.0
    %588 = vmatprep.subr.mxu0 0.0
    %589 = vmatpush1.msra.mxu0 0.0
    %590 = vmatprep.subr.mxu0 0.0
    %591 = vmatpush1.msra.mxu0 0.0
    %592 = vmatprep.subr.mxu0 0.0
    %593 = vmatpush1.msra.mxu0 0.0
    %594 = vmatprep.subr.mxu0 0.0
    %595 = vmatpush1.msra.mxu0 0.0
    %596 = vmatprep.subr.mxu0 0.0
    %597 = vmatpush1.msra.mxu0 0.0
    %598 = vmatprep.subr.mxu0 0.0
    %599 = vmatpush1.msra.mxu0 0.0
    %600 = vmatprep.subr.mxu0 0.0
    %601 = vmatpush1.msra.mxu0 0.0
    %602 = vmatprep.subr.mxu0 0.0
    %603 = vmatpush1.msra.mxu0 0.0
    %604 = vmatprep.subr.mxu0 0.0
    %605 = vmatpush1.msra.mxu0 0.0
    %606 = vmatprep.subr.mxu0 0.0
    %v607 = vand.u32 %v34, 4294901760
    %v608 = vsub.f32 %v34, %v607
    %v609 = vand.u32 %v608, 4294901760
    %v610 = vsub.f32 %v608, %v609
    %v611 = vand.u32 %v610, 4294901760
    %612 = vmatpush1.msra.mxu0 %v611
    %613 = vmatprep.subr.mxu0 0.0
    %v614 = vand.u32 %v33, 4294901760
    %v615 = vsub.f32 %v33, %v614
    %v616 = vand.u32 %v615, 4294901760
    %v617 = vsub.f32 %v615, %v616
    %v618 = vand.u32 %v617, 4294901760
    %619 = vmatpush1.msra.mxu0 %v618
    %620 = vmatprep.subr.mxu0 0.0
    %v621 = vand.u32 %v32, 4294901760
    %v622 = vsub.f32 %v32, %v621
    %v623 = vand.u32 %v622, 4294901760
    %v624 = vsub.f32 %v622, %v623
    %v625 = vand.u32 %v624, 4294901760
    %626 = vmatpush1.msra.mxu0 %v625
    %627 = vmatprep.subr.mxu0 0.0
    %v628 = vand.u32 %v31, 4294901760
    %v629 = vsub.f32 %v31, %v628
    %v630 = vand.u32 %v629, 4294901760
    %v631 = vsub.f32 %v629, %v630
    %v632 = vand.u32 %v631, 4294901760
    %633 = vmatpush1.msra.mxu0 %v632
    %634 = vmatprep.subr.mxu0 0.0
    %635 = vmatpush2.msra.mxu0 0.0
    %636 = vmatprep.subr.mxu0 0.0
    %637 = vmatpush2.msra.mxu0 0.0
    %638 = vmatprep.subr.mxu0 0.0
    %639 = vmatpush2.msra.mxu0 0.0
    %640 = vmatprep.subr.mxu0 0.0
    %641 = vmatpush2.msra.mxu0 0.0
    %642 = vmatprep.subr.mxu0 0.0
    %643 = vmatpush2.msra.mxu0 0.0
    %644 = vmatprep.subr.mxu0 0.0
    %645 = vmatpush2.msra.mxu0 0.0
    %646 = vmatprep.subr.mxu0 0.0
    %647 = vmatpush2.msra.mxu0 0.0
    %648 = vmatprep.subr.mxu0 0.0
    %649 = vmatpush2.msra.mxu0 0.0
    %650 = vmatprep.subr.mxu0 0.0
    %651 = vmatpush2.msra.mxu0 0.0
    %652 = vmatprep.subr.mxu0 0.0
    %653 = vmatpush2.msra.mxu0 0.0
    %654 = vmatprep.subr.mxu0 0.0
    %655 = vmatpush2.msra.mxu0 0.0
    %656 = vmatprep.subr.mxu0 0.0
    %657 = vmatpush2.msra.mxu0 0.0
    %658 = vmatprep.subr.mxu0 0.0
    %659 = vmatpush2.msra.mxu0 0.0
    %660 = vmatprep.subr.mxu0 0.0
    %661 = vmatpush2.msra.mxu0 0.0
    %662 = vmatprep.subr.mxu0 0.0
    %663 = vmatpush2.msra.mxu0 0.0
    %664 = vmatprep.subr.mxu0 0.0
    %665 = vmatpush2.msra.mxu0 0.0
    %666 = vmatprep.mubr.f32.mxu0 0.0
    %v667 = vand.u32 %v501, 4294901760
    %668 = vmatmul.mubr.f32.gmra.mxu0 %v667
    %v669 = vpop.f32.mrf.mxu0
    %v670 = vadd.f32 %v579, %v669
    %v671 = vpop.f32.mrf.mxu0
    %672 = vdwg.mxu0
    %673 = vmatprep.subr.mxu0 0.0
    %674 = vmatpush1.msra.mxu0 0.0
    %675 = vmatprep.subr.mxu0 0.0
    %676 = vmatpush1.msra.mxu0 0.0
    %677 = vmatprep.subr.mxu0 0.0
    %678 = vmatpush1.msra.mxu0 0.0
    %679 = vmatprep.subr.mxu0 0.0
    %680 = vmatpush1.msra.mxu0 0.0
    %681 = vmatprep.subr.mxu0 0.0
    %682 = vmatpush1.msra.mxu0 0.0
    %683 = vmatprep.subr.mxu0 0.0
    %684 = vmatpush1.msra.mxu0 0.0
    %685 = vmatprep.subr.mxu0 0.0
    %686 = vmatpush1.msra.mxu0 0.0
    %687 = vmatprep.subr.mxu0 0.0
    %688 = vmatpush1.msra.mxu0 0.0
    %689 = vmatprep.subr.mxu0 0.0
    %690 = vmatpush1.msra.mxu0 0.0
    %691 = vmatprep.subr.mxu0 0.0
    %692 = vmatpush1.msra.mxu0 0.0
    %693 = vmatprep.subr.mxu0 0.0
    %694 = vmatpush1.msra.mxu0 0.0
    %695 = vmatprep.subr.mxu0 0.0
    %696 = vmatpush1.msra.mxu0 0.0
    %697 = vmatprep.subr.mxu0 0.0
    %v698 = vand.u32 %v34, 4294901760
    %v699 = vsub.f32 %v34, %v698
    %700 = vmatpush1.msra.mxu0 %v699
    %701 = vmatprep.subr.mxu0 0.0
    %v702 = vand.u32 %v33, 4294901760
    %v703 = vsub.f32 %v33, %v702
    %704 = vmatpush1.msra.mxu0 %v703
    %705 = vmatprep.subr.mxu0 0.0
    %v706 = vand.u32 %v32, 4294901760
    %v707 = vsub.f32 %v32, %v706
    %708 = vmatpush1.msra.mxu0 %v707
    %709 = vmatprep.subr.mxu0 0.0
    %v710 = vand.u32 %v31, 4294901760
    %v711 = vsub.f32 %v31, %v710
    %712 = vmatpush1.msra.mxu0 %v711
    %713 = vmatprep.subr.mxu0 0.0
    %714 = vmatpush2.msra.mxu0 0.0
    %715 = vmatprep.subr.mxu0 0.0
    %716 = vmatpush2.msra.mxu0 0.0
    %717 = vmatprep.subr.mxu0 0.0
    %718 = vmatpush2.msra.mxu0 0.0
    %719 = vmatprep.subr.mxu0 0.0
    %720 = vmatpush2.msra.mxu0 0.0
    %721 = vmatprep.subr.mxu0 0.0
    %722 = vmatpush2.msra.mxu0 0.0
    %723 = vmatprep.subr.mxu0 0.0
    %724 = vmatpush2.msra.mxu0 0.0
    %725 = vmatprep.subr.mxu0 0.0
    %726 = vmatpush2.msra.mxu0 0.0
    %727 = vmatprep.subr.mxu0 0.0
    %728 = vmatpush2.msra.mxu0 0.0
    %729 = vmatprep.subr.mxu0 0.0
    %730 = vmatpush2.msra.mxu0 0.0
    %731 = vmatprep.subr.mxu0 0.0
    %732 = vmatpush2.msra.mxu0 0.0
    %733 = vmatprep.subr.mxu0 0.0
    %734 = vmatpush2.msra.mxu0 0.0
    %735 = vmatprep.subr.mxu0 0.0
    %736 = vmatpush2.msra.mxu0 0.0
    %737 = vmatprep.subr.mxu0 0.0
    %738 = vmatpush2.msra.mxu0 0.0
    %739 = vmatprep.subr.mxu0 0.0
    %740 = vmatpush2.msra.mxu0 0.0
    %741 = vmatprep.subr.mxu0 0.0
    %742 = vmatpush2.msra.mxu0 0.0
    %743 = vmatprep.subr.mxu0 0.0
    %744 = vmatpush2.msra.mxu0 0.0
    %745 = vmatprep.mubr.f32.mxu0 0.0
    %v746 = vand.u32 %v501, 4294901760
    %v747 = vsub.f32 %v501, %v746
    %748 = vmatmul.mubr.f32.gmra.mxu0 %v747
    %v749 = vpop.f32.mrf.mxu0
    %v750 = vadd.f32 %v670, %v749
    %v751 = vpop.f32.mrf.mxu0
    %752 = vdwg.mxu0
    %753 = vmatprep.subr.mxu0 0.0
    %754 = vmatpush1.msra.mxu0 0.0
    %755 = vmatprep.subr.mxu0 0.0
    %756 = vmatpush1.msra.mxu0 0.0
    %757 = vmatprep.subr.mxu0 0.0
    %758 = vmatpush1.msra.mxu0 0.0
    %759 = vmatprep.subr.mxu0 0.0
    %760 = vmatpush1.msra.mxu0 0.0
    %761 = vmatprep.subr.mxu0 0.0
    %762 = vmatpush1.msra.mxu0 0.0
    %763 = vmatprep.subr.mxu0 0.0
    %764 = vmatpush1.msra.mxu0 0.0
    %765 = vmatprep.subr.mxu0 0.0
    %766 = vmatpush1.msra.mxu0 0.0
    %767 = vmatprep.subr.mxu0 0.0
    %768 = vmatpush1.msra.mxu0 0.0
    %769 = vmatprep.subr.mxu0 0.0
    %770 = vmatpush1.msra.mxu0 0.0
    %771 = vmatprep.subr.mxu0 0.0
    %772 = vmatpush1.msra.mxu0 0.0
    %773 = vmatprep.subr.mxu0 0.0
    %774 = vmatpush1.msra.mxu0 0.0
    %775 = vmatprep.subr.mxu0 0.0
    %776 = vmatpush1.msra.mxu0 0.0
    %777 = vmatprep.subr.mxu0 0.0
    %v778 = vand.u32 %v34, 4294901760
    %779 = vmatpush1.msra.mxu0 %v778
    %780 = vmatprep.subr.mxu0 0.0
    %v781 = vand.u32 %v33, 4294901760
    %782 = vmatpush1.msra.mxu0 %v781
    %783 = vmatprep.subr.mxu0 0.0
    %v784 = vand.u32 %v32, 4294901760
    %785 = vmatpush1.msra.mxu0 %v784
    %786 = vmatprep.subr.mxu0 0.0
    %v787 = vand.u32 %v31, 4294901760
    %788 = vmatpush1.msra.mxu0 %v787
    %789 = vmatprep.subr.mxu0 0.0
    %790 = vmatpush2.msra.mxu0 0.0
    %791 = vmatprep.subr.mxu0 0.0
    %792 = vmatpush2.msra.mxu0 0.0
    %793 = vmatprep.subr.mxu0 0.0
    %794 = vmatpush2.msra.mxu0 0.0
    %795 = vmatprep.subr.mxu0 0.0
    %796 = vmatpush2.msra.mxu0 0.0
    %797 = vmatprep.subr.mxu0 0.0
    %798 = vmatpush2.msra.mxu0 0.0
    %799 = vmatprep.subr.mxu0 0.0
    %800 = vmatpush2.msra.mxu0 0.0
    %801 = vmatprep.subr.mxu0 0.0
    %802 = vmatpush2.msra.mxu0 0.0
    %803 = vmatprep.subr.mxu0 0.0
    %804 = vmatpush2.msra.mxu0 0.0
    %805 = vmatprep.subr.mxu0 0.0
    %806 = vmatpush2.msra.mxu0 0.0
    %807 = vmatprep.subr.mxu0 0.0
    %808 = vmatpush2.msra.mxu0 0.0
    %809 = vmatprep.subr.mxu0 0.0
    %810 = vmatpush2.msra.mxu0 0.0
    %811 = vmatprep.subr.mxu0 0.0
    %812 = vmatpush2.msra.mxu0 0.0
    %813 = vmatprep.subr.mxu0 0.0
    %814 = vmatpush2.msra.mxu0 0.0
    %815 = vmatprep.subr.mxu0 0.0
    %816 = vmatpush2.msra.mxu0 0.0
    %817 = vmatprep.subr.mxu0 0.0
    %818 = vmatpush2.msra.mxu0 0.0
    %819 = vmatprep.subr.mxu0 0.0
    %820 = vmatpush2.msra.mxu0 0.0
    %821 = vmatprep.mubr.f32.mxu0 0.0
    %v822 = vand.u32 %v501, 4294901760
    %v823 = vsub.f32 %v501, %v822
    %v824 = vand.u32 %v823, 4294901760
    %825 = vmatmul.mubr.f32.gmra.mxu0 %v824
    %v826 = vpop.f32.mrf.mxu0
    %v827 = vadd.f32 %v750, %v826
    %v828 = vpop.f32.mrf.mxu0
    %829 = vdwg.mxu0
    %830 = vmatprep.subr.mxu0 0.0
    %831 = vmatpush1.msra.mxu0 0.0
    %832 = vmatprep.subr.mxu0 0.0
    %833 = vmatpush1.msra.mxu0 0.0
    %834 = vmatprep.subr.mxu0 0.0
    %835 = vmatpush1.msra.mxu0 0.0
    %836 = vmatprep.subr.mxu0 0.0
    %837 = vmatpush1.msra.mxu0 0.0
    %838 = vmatprep.subr.mxu0 0.0
    %839 = vmatpush1.msra.mxu0 0.0
    %840 = vmatprep.subr.mxu0 0.0
    %841 = vmatpush1.msra.mxu0 0.0
    %842 = vmatprep.subr.mxu0 0.0
    %843 = vmatpush1.msra.mxu0 0.0
    %844 = vmatprep.subr.mxu0 0.0
    %845 = vmatpush1.msra.mxu0 0.0
    %846 = vmatprep.subr.mxu0 0.0
    %847 = vmatpush1.msra.mxu0 0.0
    %848 = vmatprep.subr.mxu0 0.0
    %849 = vmatpush1.msra.mxu0 0.0
    %850 = vmatprep.subr.mxu0 0.0
    %851 = vmatpush1.msra.mxu0 0.0
    %852 = vmatprep.subr.mxu0 0.0
    %853 = vmatpush1.msra.mxu0 0.0
    %854 = vmatprep.subr.mxu0 0.0
    %v855 = vand.u32 %v34, 4294901760
    %v856 = vsub.f32 %v34, %v855
    %v857 = vand.u32 %v856, 4294901760
    %858 = vmatpush1.msra.mxu0 %v857
    %859 = vmatprep.subr.mxu0 0.0
    %v860 = vand.u32 %v33, 4294901760
    %v861 = vsub.f32 %v33, %v860
    %v862 = vand.u32 %v861, 4294901760
    %863 = vmatpush1.msra.mxu0 %v862
    %864 = vmatprep.subr.mxu0 0.0
    %v865 = vand.u32 %v32, 4294901760
    %v866 = vsub.f32 %v32, %v865
    %v867 = vand.u32 %v866, 4294901760
    %868 = vmatpush1.msra.mxu0 %v867
    %869 = vmatprep.subr.mxu0 0.0
    %v870 = vand.u32 %v31, 4294901760
    %v871 = vsub.f32 %v31, %v870
    %v872 = vand.u32 %v871, 4294901760
    %873 = vmatpush1.msra.mxu0 %v872
    %874 = vmatprep.subr.mxu0 0.0
    %875 = vmatpush2.msra.mxu0 0.0
    %876 = vmatprep.subr.mxu0 0.0
    %877 = vmatpush2.msra.mxu0 0.0
    %878 = vmatprep.subr.mxu0 0.0
    %879 = vmatpush2.msra.mxu0 0.0
    %880 = vmatprep.subr.mxu0 0.0
    %881 = vmatpush2.msra.mxu0 0.0
    %882 = vmatprep.subr.mxu0 0.0
    %883 = vmatpush2.msra.mxu0 0.0
    %884 = vmatprep.subr.mxu0 0.0
    %885 = vmatpush2.msra.mxu0 0.0
    %886 = vmatprep.subr.mxu0 0.0
    %887 = vmatpush2.msra.mxu0 0.0
    %888 = vmatprep.subr.mxu0 0.0
    %889 = vmatpush2.msra.mxu0 0.0
    %890 = vmatprep.subr.mxu0 0.0
    %891 = vmatpush2.msra.mxu0 0.0
    %892 = vmatprep.subr.mxu0 0.0
    %893 = vmatpush2.msra.mxu0 0.0
    %894 = vmatprep.subr.mxu0 0.0
    %895 = vmatpush2.msra.mxu0 0.0
    %896 = vmatprep.subr.mxu0 0.0
    %897 = vmatpush2.msra.mxu0 0.0
    %898 = vmatprep.subr.mxu0 0.0
    %899 = vmatpush2.msra.mxu0 0.0
    %900 = vmatprep.subr.mxu0 0.0
    %901 = vmatpush2.msra.mxu0 0.0
    %902 = vmatprep.subr.mxu0 0.0
    %903 = vmatpush2.msra.mxu0 0.0
    %904 = vmatprep.subr.mxu0 0.0
    %905 = vmatpush2.msra.mxu0 0.0
    %906 = vmatprep.mubr.f32.mxu0 0.0
    %v907 = vand.u32 %v501, 4294901760
    %908 = vmatmul.mubr.f32.gmra.mxu0 %v907
    %v909 = vpop.f32.mrf.mxu0
    %v910 = vadd.f32 %v827, %v909
    %v911 = vpop.f32.mrf.mxu0
    %912 = vdwg.mxu0
    %913 = vmatprep.subr.mxu0 0.0
    %914 = vmatpush1.msra.mxu0 0.0
    %915 = vmatprep.subr.mxu0 0.0
    %916 = vmatpush1.msra.mxu0 0.0
    %917 = vmatprep.subr.mxu0 0.0
    %918 = vmatpush1.msra.mxu0 0.0
    %919 = vmatprep.subr.mxu0 0.0
    %920 = vmatpush1.msra.mxu0 0.0
    %921 = vmatprep.subr.mxu0 0.0
    %922 = vmatpush1.msra.mxu0 0.0
    %923 = vmatprep.subr.mxu0 0.0
    %924 = vmatpush1.msra.mxu0 0.0
    %925 = vmatprep.subr.mxu0 0.0
    %926 = vmatpush1.msra.mxu0 0.0
    %927 = vmatprep.subr.mxu0 0.0
    %928 = vmatpush1.msra.mxu0 0.0
    %929 = vmatprep.subr.mxu0 0.0
    %930 = vmatpush1.msra.mxu0 0.0
    %931 = vmatprep.subr.mxu0 0.0
    %932 = vmatpush1.msra.mxu0 0.0
    %933 = vmatprep.subr.mxu0 0.0
    %934 = vmatpush1.msra.mxu0 0.0
    %935 = vmatprep.subr.mxu0 0.0
    %936 = vmatpush1.msra.mxu0 0.0
    %937 = vmatprep.subr.mxu0 0.0
    %v938 = vand.u32 %v34, 4294901760
    %939 = vmatpush1.msra.mxu0 %v938
    %940 = vmatprep.subr.mxu0 0.0
    %v941 = vand.u32 %v33, 4294901760
    %942 = vmatpush1.msra.mxu0 %v941
    %943 = vmatprep.subr.mxu0 0.0
    %v944 = vand.u32 %v32, 4294901760
    %945 = vmatpush1.msra.mxu0 %v944
    %946 = vmatprep.subr.mxu0 0.0
    %v947 = vand.u32 %v31, 4294901760
    %948 = vmatpush1.msra.mxu0 %v947
    %949 = vmatprep.subr.mxu0 0.0
    %950 = vmatpush2.msra.mxu0 0.0
    %951 = vmatprep.subr.mxu0 0.0
    %952 = vmatpush2.msra.mxu0 0.0
    %953 = vmatprep.subr.mxu0 0.0
    %954 = vmatpush2.msra.mxu0 0.0
    %955 = vmatprep.subr.mxu0 0.0
    %956 = vmatpush2.msra.mxu0 0.0
    %957 = vmatprep.subr.mxu0 0.0
    %958 = vmatpush2.msra.mxu0 0.0
    %959 = vmatprep.subr.mxu0 0.0
    %960 = vmatpush2.msra.mxu0 0.0
    %961 = vmatprep.subr.mxu0 0.0
    %962 = vmatpush2.msra.mxu0 0.0
    %963 = vmatprep.subr.mxu0 0.0
    %964 = vmatpush2.msra.mxu0 0.0
    %965 = vmatprep.subr.mxu0 0.0
    %966 = vmatpush2.msra.mxu0 0.0
    %967 = vmatprep.subr.mxu0 0.0
    %968 = vmatpush2.msra.mxu0 0.0
    %969 = vmatprep.subr.mxu0 0.0
    %970 = vmatpush2.msra.mxu0 0.0
    %971 = vmatprep.subr.mxu0 0.0
    %972 = vmatpush2.msra.mxu0 0.0
    %973 = vmatprep.subr.mxu0 0.0
    %974 = vmatpush2.msra.mxu0 0.0
    %975 = vmatprep.subr.mxu0 0.0
    %976 = vmatpush2.msra.mxu0 0.0
    %977 = vmatprep.subr.mxu0 0.0
    %978 = vmatpush2.msra.mxu0 0.0
    %979 = vmatprep.subr.mxu0 0.0
    %980 = vmatpush2.msra.mxu0 0.0
    %981 = vmatprep.mubr.f32.mxu0 0.0
    %v982 = vand.u32 %v501, 4294901760
    %983 = vmatmul.mubr.f32.gmra.mxu0 %v982
    %v984 = vpop.f32.mrf.mxu0
    %v985 = vadd.f32 %v910, %v984
    %v986 = vpop.f32.mrf.mxu0
    %987 = vdwg.mxu0
    %v988 = vtanh.pop %v985
    %989 = vst [vmem:[%s2] sm:$0xff] 0.0
    %990 = vst [vmem:[%s2] sm:$0x1] %v498
    %991 = vst [vmem:[%s2 + $0x1] sm:$0x1] %v988
    %992 = vst [vmem:[%s2 + $0x2] sm:$0x1] %v28
    // Predicated region
    $region14: #{contribution_rnn_forward.1} parent=1 // pred_check
      _
    $region15: #{contribution_rnn_forward.1} parent=1 // pred_check_branch
      %994 = sbr.rel (0) target = $region17
    $region16: #{contribution_rnn_forward.1} parent=1 // pred_region
      _
    $region17: #{contribution_rnn_forward.1} parent=1 // pred_fallthru
      _
    // Predicated region
    $region18: #{contribution_rnn_forward.1} parent=1 // pred_check
      _
    $region19: #{contribution_rnn_forward.1} parent=1 // pred_check_branch
      %996 = sbr.rel (0) target = $region21
    $region20: #{contribution_rnn_forward.1} parent=1 // pred_region
      _
    $region21: #{contribution_rnn_forward.1} parent=1 // pred_fallthru
      _
    %997 = vsyncpa [#allocation3], 1

</llo_original>
